<compile_context>
chip_gen: v7x
topology: tpu7x:2x2x1
jax: 0.10.0
libtpu: 0.0.40
codegen_flags: <defaults>
</compile_context>

<pallas_src>
from functools import partial

import numpy as np
import jax
import jax.numpy as jnp
from jax.experimental import pallas as pl
from jax.experimental.pallas import tpu as pltpu

N_WIRES = 4
DIM = 2 ** N_WIRES          # 16
MAX_TILE_B = 8192           # lane-tile cap: per-step VMEM stays well under the scoped limit


# ---------------------------------------------------------------------------
# Host-side (deterministic) construction of the entangling unitary & tables.
# ---------------------------------------------------------------------------
def _rot_matrix(phi, theta, omega):
    # PennyLane Rot(phi, theta, omega) = RZ(omega) RY(theta) RZ(phi)
    c, s = np.cos(theta / 2.0), np.sin(theta / 2.0)
    return np.array(
        [[np.exp(-0.5j * (phi + omega)) * c, -np.exp(0.5j * (phi - omega)) * s],
         [np.exp(-0.5j * (phi - omega)) * s, np.exp(0.5j * (phi + omega)) * c]],
        dtype=np.complex128)


def _single_qubit_op(gate, wire, n=N_WIRES):
    op = np.array([[1.0]], dtype=np.complex128)
    for i in range(n):  # wire 0 is the most-significant qubit (PennyLane convention)
        op = np.kron(op, gate if i == wire else np.eye(2, dtype=np.complex128))
    return op


def _cnot_matrix(control, target, n=N_WIRES):
    d = 2 ** n
    U = np.zeros((d, d), dtype=np.complex128)
    for k in range(d):
        if (k >> (n - 1 - control)) & 1:
            j = k ^ (1 << (n - 1 - target))
        else:
            j = k
        U[j, k] = 1.0
    return U


def entangling_unitary(weights):
    """StronglyEntanglingLayers(weights (L,4,3)) with default ranges & CNOT imprimitive."""
    L, n, _ = weights.shape
    U = np.eye(2 ** n, dtype=np.complex128)
    for l in range(L):
        r = (l % (n - 1)) + 1  # PennyLane default ranges
        for i in range(n):
            phi, theta, omega = weights[l, i]
            U = _single_qubit_op(_rot_matrix(phi, theta, omega), i, n) @ U
        for i in range(n):
            U = _cnot_matrix(i, (i + r) % n, n) @ U
    return U


def build_params(quantum_weights, w1, b1, w2, b2, w3, b3):
    """Precompute all input-independent (folded) matrices, batch-on-lanes layout."""
    U = entangling_unitary(quantum_weights)                                  # (16,16) complex
    bits = np.array([[(k >> (N_WIRES - 1 - i)) & 1 for i in range(N_WIRES)]
                     for k in range(DIM)], dtype=np.float64)                 # (16, 4)
    popc = bits.sum(axis=1).astype(np.int64) % 4
    phase = np.array([1.0, -1.0j, -1.0, 1.0j], dtype=np.complex128)[popc]    # (-i)^popcount
    V = U * phase[None, :]                        # fold RX phase into the unitary columns
    vri = np.concatenate([V.real, V.imag], axis=0)                           # (32, 16)
    zsign = 1.0 - 2.0 * bits                                                 # (16, 4)
    w1q = zsign @ w1                              # exact linear fusion of <Z> into fc1
    params = {
        "bits": jnp.asarray(bits, jnp.float32),                              # (16, 4)
        "vri":  jnp.asarray(vri, jnp.float32),                               # (32, 16)
        "w1qT": jnp.asarray(w1q.T, jnp.float32),                             # (64, 16)
        "b1":   jnp.asarray(b1[:, None], jnp.float32),                       # (64, 1)
        "w2T":  jnp.asarray(w2.T, jnp.float32),                              # (32, 64)
        "b2":   jnp.asarray(b2[:, None], jnp.float32),                       # (32, 1)
        "w3d":  jnp.asarray((w3[:, 1] - w3[:, 0])[None, :], jnp.float32),    # (1, 32)
        "b3d":  jnp.asarray(np.array([[b3[1] - b3[0]]]), jnp.float32),       # (1, 1)
    }
    return params, U


# ---------------------------------------------------------------------------
# Pallas kernel: quantum-layer simulation + MLP + softmax. Batch on lanes.
# ---------------------------------------------------------------------------
def qnn_kernel(x_ref, bits_ref, vri_ref, w1_ref, b1_ref, w2_ref, b2_ref,
               w3d_ref, b3d_ref, out_ref):
    x = x_ref[...]                               # (4, TB) rotation angles, batch on lanes
    c = jnp.cos(0.5 * x)
    s = jnp.sin(0.5 * x)
    bits = bits_ref[...]                         # (16, 4)
    nbits = 1.0 - bits                           # hoisted once per tile

    # Embedded-state magnitude m[k, b] = prod_i (bit_i(k) ? sin(x_ib/2) : cos(x_ib/2))
    m = bits[:, 0:1] * s[0:1, :] + nbits[:, 0:1] * c[0:1, :]                 # (16, TB)
    for i in range(1, N_WIRES):                  # statically unrolled
        m = m * (bits[:, i:i + 1] * s[i:i + 1, :] + nbits[:, i:i + 1] * c[i:i + 1, :])

    # phi = (U * phase) @ m  -- real & imaginary stacked into one (32,16) matrix.
    phi = jnp.dot(vri_ref[...], m, preferred_element_type=jnp.float32)       # (32, TB)
    phi_re = phi[:DIM, :]
    phi_im = phi[DIM:, :]
    probs = phi_re * phi_re + phi_im * phi_im                                # (16, TB)

    # MLP (zsign folded into fc1): relu(W1q^T probs + b1) -> relu(W2^T h1 + b2)
    h1 = jnp.maximum(
        jnp.dot(w1_ref[...], probs, preferred_element_type=jnp.float32) + b1_ref[...],
        0.0)                                                                 # (64, TB)
    h2 = jnp.maximum(
        jnp.dot(w2_ref[...], h1, preferred_element_type=jnp.float32) + b2_ref[...],
        0.0)                                                                 # (32, TB)

    # Exact 2-class softmax via logit difference: p1 = sigmoid(l1-l0), p0 = sigmoid(l0-l1).
    d = jnp.dot(w3d_ref[...], h2, preferred_element_type=jnp.float32) + b3d_ref[...]  # (1, TB)
    p1 = 1.0 / (1.0 + jnp.exp(-d))
    p0 = 1.0 / (1.0 + jnp.exp(d))
    out_ref[...] = jnp.concatenate([p0, p1], axis=0)                         # (2, TB)


def _round_up(n, m):
    return ((n + m - 1) // m) * m


@partial(jax.jit, static_argnames=("tile_b",))
def quantum_neural_net(x, params, *, tile_b=MAX_TILE_B):
    """x: (B, 4) float32 -> (B, 2) softmax probabilities."""
    B = x.shape[0]
    tb = min(tile_b, _round_up(max(B, 1), 128))      # lane tile, multiple of 128
    b_pad = _round_up(B, tb)
    xt = jnp.pad(jnp.asarray(x, jnp.float32).T, ((0, 0), (0, b_pad - B)))    # (4, b_pad)

    def const(shape):
        return pl.BlockSpec(shape, lambda i: (0, 0))  # resident across grid steps

    out = pl.pallas_call(
        qnn_kernel,
        out_shape=jax.ShapeDtypeStruct((2, b_pad), jnp.float32),
        grid=(b_pad // tb,),
        in_specs=[
            pl.BlockSpec((4, tb), lambda i: (0, i)),   # x tile streams over the batch
            const((DIM, N_WIRES)),                     # bits
            const((2 * DIM, DIM)),                     # [Re(V); Im(V)]
            const((64, DIM)),                          # W1q^T  (Z-sign folded into fc1)
            const((64, 1)),                            # b1
            const((32, 64)),                           # W2^T
            const((32, 1)),                            # b2
            const((1, 32)),                            # w3[:,1]-w3[:,0]
            const((1, 1)),                             # b3[1]-b3[0]
        ],
        out_specs=pl.BlockSpec((2, tb), lambda i: (0, i)),
        compiler_params=pltpu.CompilerParams(
            dimension_semantics=("parallel",)),        # shard batch tiles across TCs (v7x)
    )(xt, params["bits"], params["vri"], params["w1qT"], params["b1"],
      params["w2T"], params["b2"], params["w3d"], params["b3d"])
    return out[:, :B].T                                # (B, 2)


# ---------------------------------------------------------------------------
# Pure-numpy reference (mirrors the PyTorch/PennyLane forward semantics).
# ---------------------------------------------------------------------------
def reference_forward(x_np, U, w1, b1, w2, b2, w3, b3):
    B = x_np.shape[0]
    qout = np.zeros((B, N_WIRES), dtype=np.float64)
    for b in range(B):
        psi = np.array([1.0 + 0.0j])
        for i in range(N_WIRES):  # RX(x_i)|0>
            psi = np.kron(psi, np.array([np.cos(x_np[b, i] / 2),
                                         -1j * np.sin(x_np[b, i] / 2)]))
        phi = U @ psi
        probs = np.abs(phi) ** 2
        for i in range(N_WIRES):
            sign = np.array([1.0 - 2.0 * ((k >> (N_WIRES - 1 - i)) & 1) for k in range(DIM)])
            qout[b, i] = np.sum(probs * sign)
    h1 = np.maximum(qout @ w1 + b1, 0.0)
    h2 = np.maximum(h1 @ w2 + b2, 0.0)
    logits = h2 @ w3 + b3
    e = np.exp(logits - logits.max(axis=1, keepdims=True))
    return e / e.sum(axis=1, keepdims=True)


if __name__ == "__main__":
    key = jax.random.PRNGKey(0)
    k_qw, k_x, k1, k2, k3, kb1, kb2, kb3 = jax.random.split(key, 8)

    # Parameters (shapes from __init__: quantum_weights (3,4,3), fc 4->64->32->2)
    quantum_weights = np.asarray(0.01 * jax.random.normal(k_qw, (3, 4, 3)), dtype=np.float64)
    w1 = np.asarray(0.1 * jax.random.normal(k1, (4, 64)), dtype=np.float64)
    b1 = np.asarray(0.1 * jax.random.normal(kb1, (64,)), dtype=np.float64)
    w2 = np.asarray(0.1 * jax.random.normal(k2, (64, 32)), dtype=np.float64)
    b2 = np.asarray(0.1 * jax.random.normal(kb2, (32,)), dtype=np.float64)
    w3 = np.asarray(0.1 * jax.random.normal(k3, (32, 2)), dtype=np.float64)
    b3 = np.asarray(0.1 * jax.random.normal(kb3, (2,)), dtype=np.float64)

    params, U = build_params(quantum_weights, w1, b1, w2, b2, w3, b3)

    # Small example matching the module's (batch, 4) input: batch=2.
    x = jax.random.uniform(k_x, (2, 4), minval=-np.pi, maxval=np.pi, dtype=jnp.float32)
    out = jax.block_until_ready(quantum_neural_net(x, params))
    ref = reference_forward(np.asarray(x, np.float64), U, w1, b1, w2, b2, w3, b3)
    np.testing.assert_allclose(np.asarray(out), ref, rtol=1e-4, atol=1e-5)
    assert out.shape == (2, 2)
    np.testing.assert_allclose(np.asarray(out).sum(axis=1), np.ones(2), rtol=1e-5)

    # Exercise the multi-step batch grid (padding + several tiles) as well.
    xb = jax.random.uniform(jax.random.PRNGKey(1), (300, 4),
                            minval=-np.pi, maxval=np.pi, dtype=jnp.float32)
    outb = jax.block_until_ready(quantum_neural_net(xb, params, tile_b=128))
    refb = reference_forward(np.asarray(xb, np.float64), U, w1, b1, w2, b2, w3, b3)
    np.testing.assert_allclose(np.asarray(outb), refb, rtol=1e-4, atol=1e-5)

    print("KERNEL_OK")
</pallas_src>

<mosaic_0001>
module attributes {stable_mosaic.version = 11 : i64} {
  func.func @qnn_kernel(%arg0: i32, %arg1: memref<4x128xf32, #tpu.memory_space<vmem>>, %arg2: memref<16x4xf32, #tpu.memory_space<vmem>>, %arg3: memref<32x16xf32, #tpu.memory_space<vmem>>, %arg4: memref<64x16xf32, #tpu.memory_space<vmem>>, %arg5: memref<64x1xf32, #tpu.memory_space<vmem>>, %arg6: memref<32x64xf32, #tpu.memory_space<vmem>>, %arg7: memref<32x1xf32, #tpu.memory_space<vmem>>, %arg8: memref<1x32xf32, #tpu.memory_space<vmem>>, %arg9: memref<1x1xf32, #tpu.memory_space<vmem>>, %arg10: memref<2x128xf32, #tpu.memory_space<vmem>>) attributes {dimension_semantics = [#tpu.dimension_semantics<parallel>], iteration_bounds = array<i64: 1>, scalar_prefetch = 0 : i64, scratch_operands = 0 : i64, tpu.core_type = #tpu.core_type<tc>, window_params = [{transform_indices = @transform_0, window_bounds = array<i64: 4, 128>}, {pipeline_mode = #tpu.pipeline_mode<synchronous>, transform_indices = @transform_1, window_bounds = array<i64: 16, 4>}, {pipeline_mode = #tpu.pipeline_mode<synchronous>, transform_indices = @transform_2, window_bounds = array<i64: 32, 16>}, {pipeline_mode = #tpu.pipeline_mode<synchronous>, transform_indices = @transform_3, window_bounds = array<i64: 64, 16>}, {pipeline_mode = #tpu.pipeline_mode<synchronous>, transform_indices = @transform_4, window_bounds = array<i64: 64, 1>}, {pipeline_mode = #tpu.pipeline_mode<synchronous>, transform_indices = @transform_5, window_bounds = array<i64: 32, 64>}, {pipeline_mode = #tpu.pipeline_mode<synchronous>, transform_indices = @transform_6, window_bounds = array<i64: 32, 1>}, {pipeline_mode = #tpu.pipeline_mode<synchronous>, transform_indices = @transform_7, window_bounds = array<i64: 1, 32>}, {pipeline_mode = #tpu.pipeline_mode<synchronous>, transform_indices = @transform_8, window_bounds = array<i64: 1, 1>}, {transform_indices = @transform_9, window_bounds = array<i64: 2, 128>}]} {
    %c0 = arith.constant 0 : index
    %c0_0 = arith.constant 0 : index
    %0 = vector.load %arg1[%c0, %c0_0] : memref<4x128xf32, #tpu.memory_space<vmem>>, vector<4x128xf32>
    %cst = arith.constant 5.000000e-01 : f32
    %1 = vector.broadcast %cst : f32 to vector<4x128xf32>
    %2 = arith.mulf %1, %0 : vector<4x128xf32>
    %3 = math.cos %2 : vector<4x128xf32>
    %cst_1 = arith.constant 5.000000e-01 : f32
    %4 = vector.broadcast %cst_1 : f32 to vector<4x128xf32>
    %5 = arith.mulf %4, %0 : vector<4x128xf32>
    %6 = math.sin %5 : vector<4x128xf32>
    %c0_2 = arith.constant 0 : index
    %c0_3 = arith.constant 0 : index
    %7 = vector.load %arg2[%c0_2, %c0_3] : memref<16x4xf32, #tpu.memory_space<vmem>>, vector<16x4xf32>
    %cst_4 = arith.constant 1.000000e+00 : f32
    %8 = vector.broadcast %cst_4 : f32 to vector<16x4xf32>
    %9 = arith.subf %8, %7 : vector<16x4xf32>
    %10 = vector.extract_strided_slice %7 {offsets = [0, 0], sizes = [16, 1], strides = [1, 1]} : vector<16x4xf32> to vector<16x1xf32>
    %11 = vector.extract_strided_slice %6 {offsets = [0, 0], sizes = [1, 128], strides = [1, 1]} : vector<4x128xf32> to vector<1x128xf32>
    %12 = vector.broadcast %10 : vector<16x1xf32> to vector<16x128xf32>
    %13 = vector.broadcast %11 : vector<1x128xf32> to vector<16x128xf32>
    %14 = arith.mulf %12, %13 : vector<16x128xf32>
    %15 = vector.extract_strided_slice %9 {offsets = [0, 0], sizes = [16, 1], strides = [1, 1]} : vector<16x4xf32> to vector<16x1xf32>
    %16 = vector.extract_strided_slice %3 {offsets = [0, 0], sizes = [1, 128], strides = [1, 1]} : vector<4x128xf32> to vector<1x128xf32>
    %17 = vector.broadcast %15 : vector<16x1xf32> to vector<16x128xf32>
    %18 = vector.broadcast %16 : vector<1x128xf32> to vector<16x128xf32>
    %19 = arith.mulf %17, %18 : vector<16x128xf32>
    %20 = arith.addf %14, %19 : vector<16x128xf32>
    %21 = vector.extract_strided_slice %7 {offsets = [0, 1], sizes = [16, 1], strides = [1, 1]} : vector<16x4xf32> to vector<16x1xf32>
    %22 = vector.extract_strided_slice %6 {offsets = [1, 0], sizes = [1, 128], strides = [1, 1]} : vector<4x128xf32> to vector<1x128xf32>
    %23 = vector.broadcast %21 : vector<16x1xf32> to vector<16x128xf32>
    %24 = vector.broadcast %22 : vector<1x128xf32> to vector<16x128xf32>
    %25 = arith.mulf %23, %24 : vector<16x128xf32>
    %26 = vector.extract_strided_slice %9 {offsets = [0, 1], sizes = [16, 1], strides = [1, 1]} : vector<16x4xf32> to vector<16x1xf32>
    %27 = vector.extract_strided_slice %3 {offsets = [1, 0], sizes = [1, 128], strides = [1, 1]} : vector<4x128xf32> to vector<1x128xf32>
    %28 = vector.broadcast %26 : vector<16x1xf32> to vector<16x128xf32>
    %29 = vector.broadcast %27 : vector<1x128xf32> to vector<16x128xf32>
    %30 = arith.mulf %28, %29 : vector<16x128xf32>
    %31 = arith.addf %25, %30 : vector<16x128xf32>
    %32 = arith.mulf %20, %31 : vector<16x128xf32>
    %33 = vector.extract_strided_slice %7 {offsets = [0, 2], sizes = [16, 1], strides = [1, 1]} : vector<16x4xf32> to vector<16x1xf32>
    %34 = vector.extract_strided_slice %6 {offsets = [2, 0], sizes = [1, 128], strides = [1, 1]} : vector<4x128xf32> to vector<1x128xf32>
    %35 = vector.broadcast %33 : vector<16x1xf32> to vector<16x128xf32>
    %36 = vector.broadcast %34 : vector<1x128xf32> to vector<16x128xf32>
    %37 = arith.mulf %35, %36 : vector<16x128xf32>
    %38 = vector.extract_strided_slice %9 {offsets = [0, 2], sizes = [16, 1], strides = [1, 1]} : vector<16x4xf32> to vector<16x1xf32>
    %39 = vector.extract_strided_slice %3 {offsets = [2, 0], sizes = [1, 128], strides = [1, 1]} : vector<4x128xf32> to vector<1x128xf32>
    %40 = vector.broadcast %38 : vector<16x1xf32> to vector<16x128xf32>
    %41 = vector.broadcast %39 : vector<1x128xf32> to vector<16x128xf32>
    %42 = arith.mulf %40, %41 : vector<16x128xf32>
    %43 = arith.addf %37, %42 : vector<16x128xf32>
    %44 = arith.mulf %32, %43 : vector<16x128xf32>
    %45 = vector.extract_strided_slice %7 {offsets = [0, 3], sizes = [16, 1], strides = [1, 1]} : vector<16x4xf32> to vector<16x1xf32>
    %46 = vector.extract_strided_slice %6 {offsets = [3, 0], sizes = [1, 128], strides = [1, 1]} : vector<4x128xf32> to vector<1x128xf32>
    %47 = vector.broadcast %45 : vector<16x1xf32> to vector<16x128xf32>
    %48 = vector.broadcast %46 : vector<1x128xf32> to vector<16x128xf32>
    %49 = arith.mulf %47, %48 : vector<16x128xf32>
    %50 = vector.extract_strided_slice %9 {offsets = [0, 3], sizes = [16, 1], strides = [1, 1]} : vector<16x4xf32> to vector<16x1xf32>
    %51 = vector.extract_strided_slice %3 {offsets = [3, 0], sizes = [1, 128], strides = [1, 1]} : vector<4x128xf32> to vector<1x128xf32>
    %52 = vector.broadcast %50 : vector<16x1xf32> to vector<16x128xf32>
    %53 = vector.broadcast %51 : vector<1x128xf32> to vector<16x128xf32>
    %54 = arith.mulf %52, %53 : vector<16x128xf32>
    %55 = arith.addf %49, %54 : vector<16x128xf32>
    %56 = arith.mulf %44, %55 : vector<16x128xf32>
    %c0_5 = arith.constant 0 : index
    %c0_6 = arith.constant 0 : index
    %57 = vector.load %arg3[%c0_5, %c0_6] : memref<32x16xf32, #tpu.memory_space<vmem>>, vector<32x16xf32>
    %cst_7 = arith.constant dense<0.000000e+00> : vector<32x128xf32>
    %58 = tpu.matmul %57, %56, %cst_7 {dimension_numbers = #tpu.dot_dimension_numbers<[1], [0], [0], [1], [0, 0, 1, 1], [], []>} : vector<32x16xf32>, vector<16x128xf32>, vector<32x128xf32> -> vector<32x128xf32>
    %59 = vector.extract_strided_slice %58 {offsets = [0, 0], sizes = [16, 128], strides = [1, 1]} : vector<32x128xf32> to vector<16x128xf32>
    %60 = vector.extract_strided_slice %58 {offsets = [16, 0], sizes = [16, 128], strides = [1, 1]} : vector<32x128xf32> to vector<16x128xf32>
    %61 = arith.mulf %59, %59 : vector<16x128xf32>
    %62 = arith.mulf %60, %60 : vector<16x128xf32>
    %63 = arith.addf %61, %62 : vector<16x128xf32>
    %c0_8 = arith.constant 0 : index
    %c0_9 = arith.constant 0 : index
    %64 = vector.load %arg4[%c0_8, %c0_9] : memref<64x16xf32, #tpu.memory_space<vmem>>, vector<64x16xf32>
    %cst_10 = arith.constant dense<0.000000e+00> : vector<64x128xf32>
    %65 = tpu.matmul %64, %63, %cst_10 {dimension_numbers = #tpu.dot_dimension_numbers<[1], [0], [0], [1], [0, 0, 1, 1], [], []>} : vector<64x16xf32>, vector<16x128xf32>, vector<64x128xf32> -> vector<64x128xf32>
    %c0_11 = arith.constant 0 : index
    %c0_12 = arith.constant 0 : index
    %66 = vector.load %arg5[%c0_11, %c0_12] : memref<64x1xf32, #tpu.memory_space<vmem>>, vector<64x1xf32>
    %67 = vector.broadcast %66 : vector<64x1xf32> to vector<64x128xf32>
    %68 = arith.addf %65, %67 : vector<64x128xf32>
    %cst_13 = arith.constant 0.000000e+00 : f32
    %69 = vector.broadcast %cst_13 : f32 to vector<64x128xf32>
    %70 = arith.maximumf %68, %69 : vector<64x128xf32>
    %c0_14 = arith.constant 0 : index
    %c0_15 = arith.constant 0 : index
    %71 = vector.load %arg6[%c0_14, %c0_15] : memref<32x64xf32, #tpu.memory_space<vmem>>, vector<32x64xf32>
    %cst_16 = arith.constant dense<0.000000e+00> : vector<32x128xf32>
    %72 = tpu.matmul %71, %70, %cst_16 {dimension_numbers = #tpu.dot_dimension_numbers<[1], [0], [0], [1], [0, 0, 1, 1], [], []>} : vector<32x64xf32>, vector<64x128xf32>, vector<32x128xf32> -> vector<32x128xf32>
    %c0_17 = arith.constant 0 : index
    %c0_18 = arith.constant 0 : index
    %73 = vector.load %arg7[%c0_17, %c0_18] : memref<32x1xf32, #tpu.memory_space<vmem>>, vector<32x1xf32>
    %74 = vector.broadcast %73 : vector<32x1xf32> to vector<32x128xf32>
    %75 = arith.addf %72, %74 : vector<32x128xf32>
    %cst_19 = arith.constant 0.000000e+00 : f32
    %76 = vector.broadcast %cst_19 : f32 to vector<32x128xf32>
    %77 = arith.maximumf %75, %76 : vector<32x128xf32>
    %c0_20 = arith.constant 0 : index
    %c0_21 = arith.constant 0 : index
    %78 = vector.load %arg8[%c0_20, %c0_21] : memref<1x32xf32, #tpu.memory_space<vmem>>, vector<1x32xf32>
    %cst_22 = arith.constant dense<0.000000e+00> : vector<1x128xf32>
    %79 = tpu.matmul %78, %77, %cst_22 {dimension_numbers = #tpu.dot_dimension_numbers<[1], [0], [0], [1], [0, 0, 1, 1], [], []>} : vector<1x32xf32>, vector<32x128xf32>, vector<1x128xf32> -> vector<1x128xf32>
    %c0_23 = arith.constant 0 : index
    %c0_24 = arith.constant 0 : index
    %80 = vector.load %arg9[%c0_23, %c0_24] : memref<1x1xf32, #tpu.memory_space<vmem>>, vector<1x1xf32>
    %81 = vector.broadcast %80 : vector<1x1xf32> to vector<1x128xf32>
    %82 = arith.addf %79, %81 : vector<1x128xf32>
    %cst_25 = arith.constant 0.000000e+00 : f32
    %83 = vector.broadcast %cst_25 : f32 to vector<1x128xf32>
    %84 = arith.subf %83, %82 : vector<1x128xf32>
    %85 = math.exp %84 : vector<1x128xf32>
    %cst_26 = arith.constant 1.000000e+00 : f32
    %86 = vector.broadcast %cst_26 : f32 to vector<1x128xf32>
    %87 = arith.addf %86, %85 : vector<1x128xf32>
    %cst_27 = arith.constant 1.000000e+00 : f32
    %88 = vector.broadcast %cst_27 : f32 to vector<1x128xf32>
    %89 = arith.divf %88, %87 : vector<1x128xf32>
    %90 = math.exp %82 : vector<1x128xf32>
    %cst_28 = arith.constant 1.000000e+00 : f32
    %91 = vector.broadcast %cst_28 : f32 to vector<1x128xf32>
    %92 = arith.addf %91, %90 : vector<1x128xf32>
    %cst_29 = arith.constant 1.000000e+00 : f32
    %93 = vector.broadcast %cst_29 : f32 to vector<1x128xf32>
    %94 = arith.divf %93, %92 : vector<1x128xf32>
    %95 = tpu.concatenate %94, %89 in 0 : vector<1x128xf32>, vector<1x128xf32> -> vector<2x128xf32>
    %c0_30 = arith.constant 0 : index
    %c0_31 = arith.constant 0 : index
    %96 = vector.load %arg10[%c0_30, %c0_31] : memref<2x128xf32, #tpu.memory_space<vmem>>, vector<2x128xf32>
    tpu.vector_store %arg10[%c0_30, %c0_31], %95 {strides = array<i32>} : memref<2x128xf32, #tpu.memory_space<vmem>>, vector<2x128xf32>,
    return
  }
  func.func @transform_0(%arg0: i32) -> (i32, i32) {
    %c0_i32 = arith.constant 0 : i32
    %c0_i32_0 = arith.constant 0 : i32
    return %c0_i32, %arg0 : i32, i32
  }
  func.func @transform_1(%arg0: i32) -> (i32, i32) {
    %c0_i32 = arith.constant 0 : i32
    %c0_i32_0 = arith.constant 0 : i32
    %c0_i32_1 = arith.constant 0 : i32
    return %c0_i32, %c0_i32_0 : i32, i32
  }
  func.func @transform_2(%arg0: i32) -> (i32, i32) {
    %c0_i32 = arith.constant 0 : i32
    %c0_i32_0 = arith.constant 0 : i32
    %c0_i32_1 = arith.constant 0 : i32
    return %c0_i32, %c0_i32_0 : i32, i32
  }
  func.func @transform_3(%arg0: i32) -> (i32, i32) {
    %c0_i32 = arith.constant 0 : i32
    %c0_i32_0 = arith.constant 0 : i32
    %c0_i32_1 = arith.constant 0 : i32
    return %c0_i32, %c0_i32_0 : i32, i32
  }
  func.func @transform_4(%arg0: i32) -> (i32, i32) {
    %c0_i32 = arith.constant 0 : i32
    %c0_i32_0 = arith.constant 0 : i32
    %c0_i32_1 = arith.constant 0 : i32
    return %c0_i32, %c0_i32_0 : i32, i32
  }
  func.func @transform_5(%arg0: i32) -> (i32, i32) {
    %c0_i32 = arith.constant 0 : i32
    %c0_i32_0 = arith.constant 0 : i32
    %c0_i32_1 = arith.constant 0 : i32
    return %c0_i32, %c0_i32_0 : i32, i32
  }
  func.func @transform_6(%arg0: i32) -> (i32, i32) {
    %c0_i32 = arith.constant 0 : i32
    %c0_i32_0 = arith.constant 0 : i32
    %c0_i32_1 = arith.constant 0 : i32
    return %c0_i32, %c0_i32_0 : i32, i32
  }
  func.func @transform_7(%arg0: i32) -> (i32, i32) {
    %c0_i32 = arith.constant 0 : i32
    %c0_i32_0 = arith.constant 0 : i32
    %c0_i32_1 = arith.constant 0 : i32
    return %c0_i32, %c0_i32_0 : i32, i32
  }
  func.func @transform_8(%arg0: i32) -> (i32, i32) {
    %c0_i32 = arith.constant 0 : i32
    %c0_i32_0 = arith.constant 0 : i32
    %c0_i32_1 = arith.constant 0 : i32
    return %c0_i32, %c0_i32_0 : i32, i32
  }
  func.func @transform_9(%arg0: i32) -> (i32, i32) {
    %c0_i32 = arith.constant 0 : i32
    %c0_i32_0 = arith.constant 0 : i32
    return %c0_i32, %arg0 : i32, i32
  }
}

</mosaic_0001>

<llo_original>
// kernel: quantum_neural_net.1
$region0: #{quantum_neural_net.1}
  #allocation0 [shape = 'u32[]', space=smem, size = 0x4, offset = 0x4, fixed_abs, tag = 'smem constant byte address 0x4 - core index']
  #allocation1 [shape = 'u32[144,128]{1,0:T(1,128)}', space=vmem, size = 0x12000, scoped, tag = 'internal scratch']
  #allocation2 [shape = 'f32[1,1]{1,0:T(1,128)S(1)}', space=vmem, size = 0x200, scoped, tag = 'scoped memory for quantum_neural_net.1']
  %s0 = inlined_call_operand.vmem [shape: f32[4,128], index: 0, kind: input, shape index: {}]
  %s1 = inlined_call_operand.vmem [shape: f32[16,4], index: 1, kind: input, shape index: {}]
  %s2 = inlined_call_operand.vmem [shape: f32[32,16], index: 2, kind: input, shape index: {}]
  %s3 = inlined_call_operand.vmem [shape: f32[64,16], index: 3, kind: input, shape index: {}]
  %s4 = inlined_call_operand.vmem [shape: f32[64,1], index: 4, kind: input, shape index: {}]
  %s5 = inlined_call_operand.vmem [shape: f32[32,64], index: 5, kind: input, shape index: {}]
  %s6 = inlined_call_operand.vmem [shape: f32[32,1], index: 6, kind: input, shape index: {}]
  %s7 = inlined_call_operand.vmem [shape: f32[1,32], index: 7, kind: input, shape index: {}]
  %s8 = inlined_call_operand.<no memory space> [shape: f32[1,1], index: 8, kind: input, shape index: {}]
  %s9 = inlined_call_operand.vmem [shape: f32[2,128], index: 9, kind: output, shape index: {}]
  %s10 = sld [smem:[#allocation0]]
  $region46: #{quantum_neural_net.1} parent=0
    _
  %s12 = ssub.s32 1, %s10
  %s13 = scalar_select 0, %s12, %s10
  %v14 = vstv %s8
  %15 = vst [vmem:[#allocation2] sm:$0x1] %v14
  // Predicated region
  $region2: #{quantum_neural_net.1} parent=0 // pred_check
    _
  $region3: #{quantum_neural_net.1} parent=0 // pred_check_branch
    %17 = sbr.rel (0) target = $region5
  $region4: #{quantum_neural_net.1} parent=0 // pred_region
    _
  $region5: #{quantum_neural_net.1} parent=0 // pred_fallthru
    _
  // Predicated region
  $region6: #{quantum_neural_net.1} parent=0 // pred_check
    _
  $region7: #{quantum_neural_net.1} parent=0 // pred_check_branch
    %19 = sbr.rel (0) target = $region9
  $region8: #{quantum_neural_net.1} parent=0 // pred_region
    _
  $region9: #{quantum_neural_net.1} parent=0 // pred_fallthru
    _
  // Predicated region
  $region10: #{quantum_neural_net.1} parent=0 // pred_check
    _
  $region11: #{quantum_neural_net.1} parent=0 // pred_check_branch
    %21 = sbr.rel (0) target = $region13
  $region12: #{quantum_neural_net.1} parent=0 // pred_region
    _
  $region13: #{quantum_neural_net.1} parent=0 // pred_fallthru
    _
  // Predicated region
  $region14: #{quantum_neural_net.1} parent=0 // pred_check
    _
  $region15: #{quantum_neural_net.1} parent=0 // pred_check_branch
    %23 = sbr.rel (0) target = $region17
  $region16: #{quantum_neural_net.1} parent=0 // pred_region
    _
  $region17: #{quantum_neural_net.1} parent=0 // pred_fallthru
    _
  // Predicated region
  $region18: #{quantum_neural_net.1} parent=0 // pred_check
    _
  $region19: #{quantum_neural_net.1} parent=0 // pred_check_branch
    %25 = sbr.rel (0) target = $region21
  $region20: #{quantum_neural_net.1} parent=0 // pred_region
    _
  $region21: #{quantum_neural_net.1} parent=0 // pred_fallthru
    _
  // Predicated region
  $region22: #{quantum_neural_net.1} parent=0 // pred_check
    _
  $region23: #{quantum_neural_net.1} parent=0 // pred_check_branch
    %27 = sbr.rel (0) target = $region25
  $region24: #{quantum_neural_net.1} parent=0 // pred_region
    _
  $region25: #{quantum_neural_net.1} parent=0 // pred_fallthru
    _
  // Predicated region
  $region26: #{quantum_neural_net.1} parent=0 // pred_check
    _
  $region27: #{quantum_neural_net.1} parent=0 // pred_check_branch
    %29 = sbr.rel (0) target = $region29
  $region28: #{quantum_neural_net.1} parent=0 // pred_region
    _
  $region29: #{quantum_neural_net.1} parent=0 // pred_fallthru
    _
  // Predicated region
  $region30: #{quantum_neural_net.1} parent=0 // pred_check
    _
  $region31: #{quantum_neural_net.1} parent=0 // pred_check_branch
    %31 = sbr.rel (0) target = $region33
  $region32: #{quantum_neural_net.1} parent=0 // pred_region
    _
  $region33: #{quantum_neural_net.1} parent=0 // pred_fallthru
    _
  // Predicated region
  $region34: #{quantum_neural_net.1} parent=0 // pred_check
    _
  $region35: #{quantum_neural_net.1} parent=0 // pred_check_branch
    %33 = sbr.rel (0) target = $region37
  $region36: #{quantum_neural_net.1} parent=0 // pred_region
    _
  $region37: #{quantum_neural_net.1} parent=0 // pred_fallthru
    _
  %v34 = vld [vmem:[%s0] sm:$0xf]
  %v35 = vmul.f32 %v34, 0.5
  %v36 = vand.u32 2147483647, %v35
  %vm37 = vcmp.le.f32.partialorder %v36, 0.7853982
  %vm38 = vcmp.lt.s32.totalorder %v35, 0
  %v39 = vand.u32 %v35, 2139095040
  %v40 = vshrl.u32 %v39, 23
  %v41 = vsub.s32 %v40, 127
  %v42 = vand.u32 2147483647, %v35
  %v43 = vand.u32 %v42, 8388607
  %v44 = vor.u32 %v43, 8388608
  %v45 = vsub.s32 0, %v44
  %v46 = vadd.s32 %v41, 1
  %vm47 = vcmp.gt.s32.totalorder %v46, 0
  %v48 = vsel %vm47, %v46, 0
  %v49 = vshrl.u32 %v48, 5
  %v50 = vand.u32 %v48, 31
  %v51 = vsub.s32 32, %v50
  %v52 = vshrl.u32 683565275, %v51
  %v53 = vshll.u32 683565275, %v50
  %v54 = vshrl.u32 2475754826, %v51
  %v55 = vor.u32 %v53, %v54
  %v56 = vshll.u32 2475754826, %v50
  %v57 = vshrl.u32 2131351028, %v51
  %v58 = vor.u32 %v56, %v57
  %v59 = vshll.u32 2131351028, %v50
  %v60 = vshrl.u32 2102212464, %v51
  %v61 = vor.u32 %v59, %v60
  %v62 = vshll.u32 2102212464, %v50
  %v63 = vshrl.u32 920167782, %v51
  %v64 = vor.u32 %v62, %v63
  %v65 = vshll.u32 920167782, %v50
  %v66 = vshrl.u32 1326507024, %v51
  %v67 = vor.u32 %v65, %v66
  %vm68 = vcmp.lt.s32.totalorder %v49, 1
  %vm69 = vcmp.lt.s32.totalorder %v49, 2
  %vm70 = vcmp.lt.s32.totalorder %v49, 3
  %vm71 = vcmp.lt.s32.totalorder %v49, 4
  %v72 = vsel %vm68, %v52, %v55
  %v73 = vsel %vm71, %v61, 2102212464
  %v74 = vsel %vm70, %v58, %v73
  %v75 = vsel %vm69, %v72, %v74
  %v76 = vsel %vm68, %v55, %v58
  %v77 = vsel %vm71, %v64, 920167782
  %v78 = vsel %vm70, %v61, %v77
  %v79 = vsel %vm69, %v76, %v78
  %v80 = vsel %vm68, %v58, %v61
  %v81 = vsel %vm71, %v67, 1326507024
  %v82 = vsel %vm70, %v64, %v81
  %v83 = vsel %vm69, %v80, %v82
  %v84 = vshll.u32 %v44, 8
  %v85 = vmul.u32.u64.compose %v84, %v83
  %v86 = vextract.low.u32 %v85
  %v87 = vextract.high.u32 %v85
  %v88 = vmul.u32.u64.compose %v84, %v79
  %v89 = vextract.low.u32 %v88
  %v90 = vextract.high.u32 %v88
  %v91 = vmul.u32 %v84, %v75
  %v92 = vadd.s32 %v87, %v89
  %vm93 = vc.u32 %v87, %v89
  %v94 = vadd.s32 %v90, 1
  %v95 = vsel %vm93, %v94, %v90
  %v96 = vadd.s32 %v91, %v95
  %v97 = vadd.s32 %v96, 536870912
  %v98 = vshrl.u32 %v97, 30
  %v99 = vshll.u32 %v98, 30
  %v100 = vsub.s32 %v96, %v99
  %vm101 = vcmp.lt.s32.totalorder %v100, 0
  %v102 = vsub.s32 0, %v100
  %v103 = vsel %vm101, %v102, %v100
  %v104 = vclz %v103
  %v105 = vsub.s32 %v104, 2
  %vm106 = vcmp.gt.s32.totalorder 0, %v105
  %v107 = vsel %vm106, 0, %v105
  %v108 = vsub.s32 32, %v107
  %v109 = vshll.u32 %v100, %v107
  %v110 = vshrl.u32 %v92, %v108
  %v111 = vor.u32 %v109, %v110
  %v112 = vsub.s32 4294967266, %v107
  %v113 = vadd.s32 %v112, 127
  %v114 = vshll.u32 %v113, 23
  %v115 = vor.u32 4788187, %v114
  %v116 = vand.u32 2147483647, %v115
  %v118 = vcvt.s32.f32 %v111
  %v119 = vmul.f32 %v118, %v116
  %v120 = vxor.u32 %v119, 2147483648
  %v121 = vsel %vm38, %v120, %v119
  %v122 = vsub.s32 4, %v98
  %v123 = vsel %vm38, %v122, %v98
  %v124 = vsel %vm37, %v35, %v121
  %v125 = vsel %vm37, 0, %v123
  %v126 = vcosq.f32.pop %v124
  %v127 = vsinq.f32.pop %v124
  %vm128 = vweird.f32 %v35
  %v129 = vand.u32 %v125, 3
  %vm130 = vcmp.lt.s32.totalorder %v129, 2
  %vm131 = vcmp.eq.s32.totalorder %v129, 0
  %v132 = vxor.u32 %v127, 2147483648
  %v133 = vsel %vm131, %v126, %v132
  %vm134 = vcmp.eq.s32.totalorder %v129, 2
  %v135 = vxor.u32 %v126, 2147483648
  %v136 = vsel %vm134, %v135, %v127
  %v137 = vsel %vm130, %v133, %v136
  %v138 = vsel %vm128, nan, %v137
  %v139 = vand.u32 2147483647, %v35
  %vm140 = vcmp.le.f32.partialorder %v139, 0.7853982
  %vm141 = vcmp.lt.s32.totalorder %v35, 0
  %v142 = vand.u32 %v35, 2139095040
  %v143 = vshrl.u32 %v142, 23
  %v144 = vsub.s32 %v143, 127
  %v145 = vand.u32 2147483647, %v35
  %v146 = vand.u32 %v145, 8388607
  %v147 = vor.u32 %v146, 8388608
  %v148 = vsub.s32 0, %v147
  %v149 = vadd.s32 %v144, 1
  %vm150 = vcmp.gt.s32.totalorder %v149, 0
  %v151 = vsel %vm150, %v149, 0
  %v152 = vshrl.u32 %v151, 5
  %v153 = vand.u32 %v151, 31
  %v154 = vsub.s32 32, %v153
  %v155 = vshrl.u32 683565275, %v154
  %v156 = vshll.u32 683565275, %v153
  %v157 = vshrl.u32 2475754826, %v154
  %v158 = vor.u32 %v156, %v157
  %v159 = vshll.u32 2475754826, %v153
  %v160 = vshrl.u32 2131351028, %v154
  %v161 = vor.u32 %v159, %v160
  %v162 = vshll.u32 2131351028, %v153
  %v163 = vshrl.u32 2102212464, %v154
  %v164 = vor.u32 %v162, %v163
  %v165 = vshll.u32 2102212464, %v153
  %v166 = vshrl.u32 920167782, %v154
  %v167 = vor.u32 %v165, %v166
  %v168 = vshll.u32 920167782, %v153
  %v169 = vshrl.u32 1326507024, %v154
  %v170 = vor.u32 %v168, %v169
  %vm171 = vcmp.lt.s32.totalorder %v152, 1
  %vm172 = vcmp.lt.s32.totalorder %v152, 2
  %vm173 = vcmp.lt.s32.totalorder %v152, 3
  %vm174 = vcmp.lt.s32.totalorder %v152, 4
  %v175 = vsel %vm171, %v155, %v158
  %v176 = vsel %vm174, %v164, 2102212464
  %v177 = vsel %vm173, %v161, %v176
  %v178 = vsel %vm172, %v175, %v177
  %v179 = vsel %vm171, %v158, %v161
  %v180 = vsel %vm174, %v167, 920167782
  %v181 = vsel %vm173, %v164, %v180
  %v182 = vsel %vm172, %v179, %v181
  %v183 = vsel %vm171, %v161, %v164
  %v184 = vsel %vm174, %v170, 1326507024
  %v185 = vsel %vm173, %v167, %v184
  %v186 = vsel %vm172, %v183, %v185
  %v187 = vshll.u32 %v147, 8
  %v188 = vmul.u32.u64.compose %v187, %v186
  %v189 = vextract.low.u32 %v188
  %v190 = vextract.high.u32 %v188
  %v191 = vmul.u32.u64.compose %v187, %v182
  %v192 = vextract.low.u32 %v191
  %v193 = vextract.high.u32 %v191
  %v194 = vmul.u32 %v187, %v178
  %v195 = vadd.s32 %v190, %v192
  %vm196 = vc.u32 %v190, %v192
  %v197 = vadd.s32 %v193, 1
  %v198 = vsel %vm196, %v197, %v193
  %v199 = vadd.s32 %v194, %v198
  %v200 = vadd.s32 %v199, 536870912
  %v201 = vshrl.u32 %v200, 30
  %v202 = vshll.u32 %v201, 30
  %v203 = vsub.s32 %v199, %v202
  %vm204 = vcmp.lt.s32.totalorder %v203, 0
  %v205 = vsub.s32 0, %v203
  %v206 = vsel %vm204, %v205, %v203
  %v207 = vclz %v206
  %v208 = vsub.s32 %v207, 2
  %vm209 = vcmp.gt.s32.totalorder 0, %v208
  %v210 = vsel %vm209, 0, %v208
  %v211 = vsub.s32 32, %v210
  %v212 = vshll.u32 %v203, %v210
  %v213 = vshrl.u32 %v195, %v211
  %v214 = vor.u32 %v212, %v213
  %v215 = vsub.s32 4294967266, %v210
  %v216 = vadd.s32 %v215, 127
  %v217 = vshll.u32 %v216, 23
  %v218 = vor.u32 4788187, %v217
  %v219 = vand.u32 2147483647, %v218
  %v221 = vcvt.s32.f32 %v214
  %v222 = vmul.f32 %v221, %v219
  %v223 = vxor.u32 %v222, 2147483648
  %v224 = vsel %vm141, %v223, %v222
  %v225 = vsub.s32 4, %v201
  %v226 = vsel %vm141, %v225, %v201
  %v227 = vsel %vm140, %v35, %v224
  %v228 = vsel %vm140, 0, %v226
  %v229 = vcosq.f32.pop %v227
  %v230 = vsinq.f32.pop %v227
  %vm231 = vweird.f32 %v35
  %v232 = vadd.s32 %v228, 3
  %v233 = vand.u32 %v232, 3
  %vm234 = vcmp.lt.s32.totalorder %v233, 2
  %vm235 = vcmp.eq.s32.totalorder %v233, 0
  %v236 = vxor.u32 %v230, 2147483648
  %v237 = vsel %vm235, %v229, %v236
  %vm238 = vcmp.eq.s32.totalorder %v233, 2
  %v239 = vxor.u32 %v229, 2147483648
  %v240 = vsel %vm238, %v239, %v230
  %v241 = vsel %vm234, %v237, %v240
  %v242 = vsel %vm231, nan, %v241
  %v243 = vld [vmem:[%s1] sm:$0xff]
  %v244 = vld [vmem:[%s1 + $0x8] sm:$0xff]
  %v245 = vsub.f32 1.0, %v243
  %v246 = vsub.f32 1.0, %v244
  %248 = vset.pattern.permute.xlu0 0
  %249 = vperm.xlu0 %248, %v243
  %v250 = vpop.permute.xlu0 %249
  %253 = vset.pattern.permute.xlu0 0
  %254 = vperm.xlu0 %253, %v244
  %v255 = vpop.permute.xlu0 %254
  %v257 = vlaneseq
  %v258 = vshrl.u32 %v257, 7
  %v259 = vsub.s32 0, %v258
  %v260 = vrot.slane %v242, %v259
  %v261 = vmul.f32 %v250, %v260
  %v262 = vmul.f32 %v255, %v260
  %264 = vset.pattern.permute.xlu0 0
  %265 = vperm.xlu0 %264, %v245
  %v266 = vpop.permute.xlu0 %265
  %269 = vset.pattern.permute.xlu0 0
  %270 = vperm.xlu0 %269, %v246
  %v271 = vpop.permute.xlu0 %270
  %v273 = vlaneseq
  %v274 = vshrl.u32 %v273, 7
  %v275 = vsub.s32 0, %v274
  %v276 = vrot.slane %v138, %v275
  %v277 = vmul.f32 %v266, %v276
  %v278 = vmul.f32 %v271, %v276
  %v279 = vadd.f32 %v261, %v277
  %v280 = vadd.f32 %v262, %v278
  %281 = vset.pattern.permute.xlu0 1
  %282 = vperm.xlu0 %281, %v243
  %v283 = vpop.permute.xlu0 %282
  %285 = vset.pattern.permute.xlu0 1
  %286 = vperm.xlu0 %285, %v244
  %v287 = vpop.permute.xlu0 %286
  %v289 = vlaneseq
  %v290 = vshrl.u32 %v289, 7
  %v291 = vsub.s32 1, %v290
  %v292 = vrot.slane %v242, %v291
  %v293 = vmul.f32 %v283, %v292
  %v294 = vmul.f32 %v287, %v292
  %295 = vset.pattern.permute.xlu0 1
  %296 = vperm.xlu0 %295, %v245
  %v297 = vpop.permute.xlu0 %296
  %299 = vset.pattern.permute.xlu0 1
  %300 = vperm.xlu0 %299, %v246
  %v301 = vpop.permute.xlu0 %300
  %v303 = vlaneseq
  %v304 = vshrl.u32 %v303, 7
  %v305 = vsub.s32 1, %v304
  %v306 = vrot.slane %v138, %v305
  %v307 = vmul.f32 %v297, %v306
  %v308 = vmul.f32 %v301, %v306
  %v309 = vadd.f32 %v293, %v307
  %v310 = vadd.f32 %v294, %v308
  %v311 = vmul.f32 %v279, %v309
  %v312 = vmul.f32 %v280, %v310
  %313 = vset.pattern.permute.xlu0 2
  %314 = vperm.xlu0 %313, %v243
  %v315 = vpop.permute.xlu0 %314
  %317 = vset.pattern.permute.xlu0 2
  %318 = vperm.xlu0 %317, %v244
  %v319 = vpop.permute.xlu0 %318
  %v321 = vlaneseq
  %v322 = vshrl.u32 %v321, 7
  %v323 = vsub.s32 2, %v322
  %v324 = vrot.slane %v242, %v323
  %v325 = vmul.f32 %v315, %v324
  %v326 = vmul.f32 %v319, %v324
  %327 = vset.pattern.permute.xlu0 2
  %328 = vperm.xlu0 %327, %v245
  %v329 = vpop.permute.xlu0 %328
  %331 = vset.pattern.permute.xlu0 2
  %332 = vperm.xlu0 %331, %v246
  %v333 = vpop.permute.xlu0 %332
  %v335 = vlaneseq
  %v336 = vshrl.u32 %v335, 7
  %v337 = vsub.s32 2, %v336
  %v338 = vrot.slane %v138, %v337
  %v339 = vmul.f32 %v329, %v338
  %v340 = vmul.f32 %v333, %v338
  %v341 = vadd.f32 %v325, %v339
  %v342 = vadd.f32 %v326, %v340
  %v343 = vmul.f32 %v311, %v341
  %v344 = vmul.f32 %v312, %v342
  %345 = vset.pattern.permute.xlu0 3
  %346 = vperm.xlu0 %345, %v243
  %v347 = vpop.permute.xlu0 %346
  %349 = vset.pattern.permute.xlu0 3
  %350 = vperm.xlu0 %349, %v244
  %v351 = vpop.permute.xlu0 %350
  %v353 = vlaneseq
  %v354 = vshrl.u32 %v353, 7
  %v355 = vsub.s32 3, %v354
  %v356 = vrot.slane %v242, %v355
  %v357 = vmul.f32 %v347, %v356
  %v358 = vmul.f32 %v351, %v356
  %359 = vset.pattern.permute.xlu0 3
  %360 = vperm.xlu0 %359, %v245
  %v361 = vpop.permute.xlu0 %360
  %363 = vset.pattern.permute.xlu0 3
  %364 = vperm.xlu0 %363, %v246
  %v365 = vpop.permute.xlu0 %364
  %v367 = vlaneseq
  %v368 = vshrl.u32 %v367, 7
  %v369 = vsub.s32 3, %v368
  %v370 = vrot.slane %v138, %v369
  %v371 = vmul.f32 %v361, %v370
  %v372 = vmul.f32 %v365, %v370
  %v373 = vadd.f32 %v357, %v371
  %v374 = vadd.f32 %v358, %v372
  %v375 = vmul.f32 %v343, %v373
  %v376 = vmul.f32 %v344, %v374
  %v377 = vld [vmem:[%s2] sm:$0xff]
  %v378 = vld [vmem:[%s2 + $0x8] sm:$0xff]
  %v379 = vld [vmem:[%s2 + $0x10] sm:$0xff]
  %v380 = vld [vmem:[%s2 + $0x18] sm:$0xff]
  %vm381 = vcmask 130048
  %v383 = vsel %vm381, %v377, 0
  %v386 = vsel %vm381, %v378, 0
  %v389 = vsel %vm381, %v379, 0
  %v392 = vsel %vm381, %v380, 0
  %394 = vmatprep.subr.mxu0 0.0
  %395 = vmatpush1.msra.mxu0 %v375
  %396 = vmatprep.subr.mxu0 0.0
  %397 = vmatpush1.msra.mxu0 %v376
  %398 = vmatprep.subr.mxu0 0.0
  %399 = vmatpush1.msra.mxu0 0.0
  %400 = vmatprep.subr.mxu0 0.0
  %401 = vmatpush1.msra.mxu0 0.0
  %402 = vmatprep.subr.mxu0 0.0
  %403 = vmatpush1.msra.mxu0 0.0
  %404 = vmatprep.subr.mxu0 0.0
  %405 = vmatpush1.msra.mxu0 0.0
  %406 = vmatprep.subr.mxu0 0.0
  %407 = vmatpush1.msra.mxu0 0.0
  %408 = vmatprep.subr.mxu0 0.0
  %409 = vmatpush1.msra.mxu0 0.0
  %410 = vmatprep.subr.mxu0 0.0
  %411 = vmatpush1.msra.mxu0 0.0
  %412 = vmatprep.subr.mxu0 0.0
  %413 = vmatpush1.msra.mxu0 0.0
  %414 = vmatprep.subr.mxu0 0.0
  %415 = vmatpush1.msra.mxu0 0.0
  %416 = vmatprep.subr.mxu0 0.0
  %417 = vmatpush1.msra.mxu0 0.0
  %418 = vmatprep.subr.mxu0 0.0
  %419 = vmatpush1.msra.mxu0 0.0
  %420 = vmatprep.subr.mxu0 0.0
  %421 = vmatpush1.msra.mxu0 0.0
  %422 = vmatprep.subr.mxu0 0.0
  %423 = vmatpush1.msra.mxu0 0.0
  %424 = vmatprep.subr.mxu0 0.0
  %425 = vmatpush1.msra.mxu0 0.0
  %426 = vmatprep.subr.mxu0 0.0
  %427 = vmatpush1.msra.mxu0 0.0
  %428 = vmatprep.subr.mxu0 0.0
  %429 = vmatpush1.msra.mxu0 0.0
  %430 = vmatprep.subr.mxu0 0.0
  %431 = vmatpush1.msra.mxu0 0.0
  %432 = vmatprep.subr.mxu0 0.0
  %433 = vmatpush1.msra.mxu0 0.0
  %434 = vmatprep.subr.mxu0 0.0
  %435 = vmatpush1.msra.mxu0 0.0
  %436 = vmatprep.subr.mxu0 0.0
  %437 = vmatpush1.msra.mxu0 0.0
  %438 = vmatprep.subr.mxu0 0.0
  %439 = vmatpush1.msra.mxu0 0.0
  %440 = vmatprep.subr.mxu0 0.0
  %441 = vmatpush1.msra.mxu0 0.0
  %442 = vmatprep.subr.mxu0 0.0
  %443 = vmatpush1.msra.mxu0 0.0
  %444 = vmatprep.subr.mxu0 0.0
  %445 = vmatpush1.msra.mxu0 0.0
  %446 = vmatprep.subr.mxu0 0.0
  %447 = vmatpush1.msra.mxu0 0.0
  %448 = vmatprep.subr.mxu0 0.0
  %449 = vmatpush1.msra.mxu0 0.0
  %450 = vmatprep.subr.mxu0 0.0
  %451 = vmatpush1.msra.mxu0 0.0
  %452 = vmatprep.subr.mxu0 0.0
  %453 = vmatpush1.msra.mxu0 0.0
  %454 = vmatprep.subr.mxu0 0.0
  %455 = vmatpush1.msra.mxu0 0.0
  %456 = vmatprep.subr.mxu0 0.0
  %457 = vmatpush1.msra.mxu0 0.0
  %458 = vmatprep.mubr.f32.mxu0 0.0
  %459 = vmatmul.mubr.f32.gmra.mrb[0].mxu0 %v383
  %v460 = vpop.f32.mrb[0].mxu0
  %v461 = vadd.f32 0.0, %v460
  %v462 = vpop.f32.mrb[0].mxu0
  %463 = vmatprep.mubr.f32.mxu0 0.0
  %464 = vmatmul.mubr.f32.gmra.mrb[0].mxu0 %v386
  %v465 = vpop.f32.mrb[0].mxu0
  %v466 = vadd.f32 0.0, %v465
  %v467 = vpop.f32.mrb[0].mxu0
  %468 = vmatprep.mubr.f32.mxu0 0.0
  %469 = vmatmul.mubr.f32.gmra.mrb[0].mxu0 %v389
  %v470 = vpop.f32.mrb[0].mxu0
  %v471 = vadd.f32 0.0, %v470
  %v472 = vpop.f32.mrb[0].mxu0
  %473 = vmatprep.mubr.f32.mxu0 0.0
  %474 = vmatmul.mubr.f32.gmra.mrb[0].mxu0 %v392
  %v475 = vpop.f32.mrb[0].mxu0
  %v476 = vadd.f32 0.0, %v475
  %v477 = vpop.f32.mrb[0].mxu0
  %478 = vdwg.mxu0
  %v479 = vmul.f32 %v461, %v461
  %v480 = vmul.f32 %v466, %v466
  %v481 = vmul.f32 %v471, %v471
  %v482 = vmul.f32 %v476, %v476
  %v483 = vadd.f32 %v479, %v481
  %v484 = vadd.f32 %v480, %v482
  %v485 = vld [vmem:[%s3] sm:$0xff]
  %v486 = vld [vmem:[%s3 + $0x8] sm:$0xff]
  %v487 = vld [vmem:[%s3 + $0x10] sm:$0xff]
  %v488 = vld [vmem:[%s3 + $0x18] sm:$0xff]
  %v489 = vld [vmem:[%s3 + $0x20] sm:$0xff]
  %v490 = vld [vmem:[%s3 + $0x28] sm:$0xff]
  %v491 = vld [vmem:[%s3 + $0x30] sm:$0xff]
  %v492 = vld [vmem:[%s3 + $0x38] sm:$0xff]
  %v493 = vld [vmem:[%s4] sm:$0xff]
  %v494 = vld [vmem:[%s4 + $0x8] sm:$0xff]
  %v495 = vld [vmem:[%s4 + $0x10] sm:$0xff]
  %v496 = vld [vmem:[%s4 + $0x18] sm:$0xff]
  %v497 = vld [vmem:[%s4 + $0x20] sm:$0xff]
  %v498 = vld [vmem:[%s4 + $0x28] sm:$0xff]
  %v499 = vld [vmem:[%s4 + $0x30] sm:$0xff]
  %v500 = vld [vmem:[%s4 + $0x38] sm:$0xff]
  %502 = vset.pattern.permute.xlu0 0
  %503 = vperm.xlu0 %502, %v493
  %v504 = vpop.permute.xlu0 %503
  %507 = vset.pattern.permute.xlu0 0
  %508 = vperm.xlu0 %507, %v494
  %v509 = vpop.permute.xlu0 %508
  %512 = vset.pattern.permute.xlu0 0
  %513 = vperm.xlu0 %512, %v495
  %v514 = vpop.permute.xlu0 %513
  %517 = vset.pattern.permute.xlu0 0
  %518 = vperm.xlu0 %517, %v496
  %v519 = vpop.permute.xlu0 %518
  %522 = vset.pattern.permute.xlu0 0
  %523 = vperm.xlu0 %522, %v497
  %v524 = vpop.permute.xlu0 %523
  %527 = vset.pattern.permute.xlu0 0
  %528 = vperm.xlu0 %527, %v498
  %v529 = vpop.permute.xlu0 %528
  %532 = vset.pattern.permute.xlu0 0
  %533 = vperm.xlu0 %532, %v499
  %v534 = vpop.permute.xlu0 %533
  %537 = vset.pattern.permute.xlu0 0
  %538 = vperm.xlu0 %537, %v500
  %v539 = vpop.permute.xlu0 %538
  %v542 = vsel %vm381, %v485, 0
  %v545 = vsel %vm381, %v486, 0
  %v548 = vsel %vm381, %v487, 0
  %v551 = vsel %vm381, %v488, 0
  %v554 = vsel %vm381, %v489, 0
  %v557 = vsel %vm381, %v490, 0
  %v560 = vsel %vm381, %v491, 0
  %v563 = vsel %vm381, %v492, 0
  %565 = vmatprep.subr.mxu0 0.0
  %566 = vmatpush1.msra.mxu0 %v483
  %567 = vmatprep.subr.mxu0 0.0
  %568 = vmatpush1.msra.mxu0 %v484
  %569 = vmatprep.subr.mxu0 0.0
  %570 = vmatpush1.msra.mxu0 0.0
  %571 = vmatprep.subr.mxu0 0.0
  %572 = vmatpush1.msra.mxu0 0.0
  %573 = vmatprep.subr.mxu0 0.0
  %574 = vmatpush1.msra.mxu0 0.0
  %575 = vmatprep.subr.mxu0 0.0
  %576 = vmatpush1.msra.mxu0 0.0
  %577 = vmatprep.subr.mxu0 0.0
  %578 = vmatpush1.msra.mxu0 0.0
  %579 = vmatprep.subr.mxu0 0.0
  %580 = vmatpush1.msra.mxu0 0.0
  %581 = vmatprep.subr.mxu0 0.0
  %582 = vmatpush1.msra.mxu0 0.0
  %583 = vmatprep.subr.mxu0 0.0
  %584 = vmatpush1.msra.mxu0 0.0
  %585 = vmatprep.subr.mxu0 0.0
  %586 = vmatpush1.msra.mxu0 0.0
  %587 = vmatprep.subr.mxu0 0.0
  %588 = vmatpush1.msra.mxu0 0.0
  %589 = vmatprep.subr.mxu0 0.0
  %590 = vmatpush1.msra.mxu0 0.0
  %591 = vmatprep.subr.mxu0 0.0
  %592 = vmatpush1.msra.mxu0 0.0
  %593 = vmatprep.subr.mxu0 0.0
  %594 = vmatpush1.msra.mxu0 0.0
  %595 = vmatprep.subr.mxu0 0.0
  %596 = vmatpush1.msra.mxu0 0.0
  %597 = vmatprep.subr.mxu0 0.0
  %598 = vmatpush1.msra.mxu0 0.0
  %599 = vmatprep.subr.mxu0 0.0
  %600 = vmatpush1.msra.mxu0 0.0
  %601 = vmatprep.subr.mxu0 0.0
  %602 = vmatpush1.msra.mxu0 0.0
  %603 = vmatprep.subr.mxu0 0.0
  %604 = vmatpush1.msra.mxu0 0.0
  %605 = vmatprep.subr.mxu0 0.0
  %606 = vmatpush1.msra.mxu0 0.0
  %607 = vmatprep.subr.mxu0 0.0
  %608 = vmatpush1.msra.mxu0 0.0
  %609 = vmatprep.subr.mxu0 0.0
  %610 = vmatpush1.msra.mxu0 0.0
  %611 = vmatprep.subr.mxu0 0.0
  %612 = vmatpush1.msra.mxu0 0.0
  %613 = vmatprep.subr.mxu0 0.0
  %614 = vmatpush1.msra.mxu0 0.0
  %615 = vmatprep.subr.mxu0 0.0
  %616 = vmatpush1.msra.mxu0 0.0
  %617 = vmatprep.subr.mxu0 0.0
  %618 = vmatpush1.msra.mxu0 0.0
  %619 = vmatprep.subr.mxu0 0.0
  %620 = vmatpush1.msra.mxu0 0.0
  %621 = vmatprep.subr.mxu0 0.0
  %622 = vmatpush1.msra.mxu0 0.0
  %623 = vmatprep.subr.mxu0 0.0
  %624 = vmatpush1.msra.mxu0 0.0
  %625 = vmatprep.subr.mxu0 0.0
  %626 = vmatpush1.msra.mxu0 0.0
  %627 = vmatprep.subr.mxu0 0.0
  %628 = vmatpush1.msra.mxu0 0.0
  %629 = vmatprep.mubr.f32.mxu0 0.0
  %630 = vmatmul.mubr.f32.gmra.mrb[0].mxu0 %v542
  %v631 = vpop.f32.mrb[0].mxu0
  %v632 = vadd.f32 %v504, %v631
  %v633 = vpop.f32.mrb[0].mxu0
  %634 = vmatprep.mubr.f32.mxu0 0.0
  %635 = vmatmul.mubr.f32.gmra.mrb[0].mxu0 %v545
  %v636 = vpop.f32.mrb[0].mxu0
  %v637 = vadd.f32 %v509, %v636
  %v638 = vpop.f32.mrb[0].mxu0
  %639 = vmatprep.mubr.f32.mxu0 0.0
  %640 = vmatmul.mubr.f32.gmra.mrb[0].mxu0 %v548
  %v641 = vpop.f32.mrb[0].mxu0
  %v642 = vadd.f32 %v514, %v641
  %v643 = vpop.f32.mrb[0].mxu0
  %644 = vmatprep.mubr.f32.mxu0 0.0
  %645 = vmatmul.mubr.f32.gmra.mrb[0].mxu0 %v551
  %v646 = vpop.f32.mrb[0].mxu0
  %v647 = vadd.f32 %v519, %v646
  %v648 = vpop.f32.mrb[0].mxu0
  %649 = vmatprep.mubr.f32.mxu0 0.0
  %650 = vmatmul.mubr.f32.gmra.mrb[0].mxu0 %v554
  %v651 = vpop.f32.mrb[0].mxu0
  %v652 = vadd.f32 %v524, %v651
  %v653 = vpop.f32.mrb[0].mxu0
  %654 = vmatprep.mubr.f32.mxu0 0.0
  %655 = vmatmul.mubr.f32.gmra.mrb[0].mxu0 %v557
  %v656 = vpop.f32.mrb[0].mxu0
  %v657 = vadd.f32 %v529, %v656
  %v658 = vpop.f32.mrb[0].mxu0
  %659 = vmatprep.mubr.f32.mxu0 0.0
  %660 = vmatmul.mubr.f32.gmra.mrb[0].mxu0 %v560
  %v661 = vpop.f32.mrb[0].mxu0
  %v662 = vadd.f32 %v534, %v661
  %v663 = vpop.f32.mrb[0].mxu0
  %664 = vmatprep.mubr.f32.mxu0 0.0
  %665 = vmatmul.mubr.f32.gmra.mrb[0].mxu0 %v563
  %v666 = vpop.f32.mrb[0].mxu0
  %v667 = vadd.f32 %v539, %v666
  %v668 = vpop.f32.mrb[0].mxu0
  %669 = vdwg.mxu0
  %v670 = vmax.f32 %v632, 0.0
  %v671 = vmax.f32 %v637, 0.0
  %v672 = vmax.f32 %v642, 0.0
  %v673 = vmax.f32 %v647, 0.0
  %v674 = vmax.f32 %v652, 0.0
  %v675 = vmax.f32 %v657, 0.0
  %v676 = vmax.f32 %v662, 0.0
  %v677 = vmax.f32 %v667, 0.0
  %v678 = vld [vmem:[%s5] sm:$0xff]
  %v679 = vld [vmem:[%s5 + $0x8] sm:$0xff]
  %v680 = vld [vmem:[%s5 + $0x10] sm:$0xff]
  %v681 = vld [vmem:[%s5 + $0x18] sm:$0xff]
  %v682 = vld [vmem:[%s6] sm:$0xff]
  %v683 = vld [vmem:[%s6 + $0x8] sm:$0xff]
  %v684 = vld [vmem:[%s6 + $0x10] sm:$0xff]
  %v685 = vld [vmem:[%s6 + $0x18] sm:$0xff]
  %687 = vset.pattern.permute.xlu0 0
  %688 = vperm.xlu0 %687, %v682
  %v689 = vpop.permute.xlu0 %688
  %692 = vset.pattern.permute.xlu0 0
  %693 = vperm.xlu0 %692, %v683
  %v694 = vpop.permute.xlu0 %693
  %697 = vset.pattern.permute.xlu0 0
  %698 = vperm.xlu0 %697, %v684
  %v699 = vpop.permute.xlu0 %698
  %702 = vset.pattern.permute.xlu0 0
  %703 = vperm.xlu0 %702, %v685
  %v704 = vpop.permute.xlu0 %703
  %vm706 = vcmask 523264
  %v708 = vsel %vm706, %v678, 0
  %v711 = vsel %vm706, %v679, 0
  %v714 = vsel %vm706, %v680, 0
  %v717 = vsel %vm706, %v681, 0
  %719 = vmatprep.subr.mxu0 0.0
  %720 = vmatpush1.msra.mxu0 %v670
  %721 = vmatprep.subr.mxu0 0.0
  %722 = vmatpush1.msra.mxu0 %v671
  %723 = vmatprep.subr.mxu0 0.0
  %724 = vmatpush1.msra.mxu0 %v672
  %725 = vmatprep.subr.mxu0 0.0
  %726 = vmatpush1.msra.mxu0 %v673
  %727 = vmatprep.subr.mxu0 0.0
  %728 = vmatpush1.msra.mxu0 %v674
  %729 = vmatprep.subr.mxu0 0.0
  %730 = vmatpush1.msra.mxu0 %v675
  %731 = vmatprep.subr.mxu0 0.0
  %732 = vmatpush1.msra.mxu0 %v676
  %733 = vmatprep.subr.mxu0 0.0
  %734 = vmatpush1.msra.mxu0 %v677
  %735 = vmatprep.subr.mxu0 0.0
  %736 = vmatpush1.msra.mxu0 0.0
  %737 = vmatprep.subr.mxu0 0.0
  %738 = vmatpush1.msra.mxu0 0.0
  %739 = vmatprep.subr.mxu0 0.0
  %740 = vmatpush1.msra.mxu0 0.0
  %741 = vmatprep.subr.mxu0 0.0
  %742 = vmatpush1.msra.mxu0 0.0
  %743 = vmatprep.subr.mxu0 0.0
  %744 = vmatpush1.msra.mxu0 0.0
  %745 = vmatprep.subr.mxu0 0.0
  %746 = vmatpush1.msra.mxu0 0.0
  %747 = vmatprep.subr.mxu0 0.0
  %748 = vmatpush1.msra.mxu0 0.0
  %749 = vmatprep.subr.mxu0 0.0
  %750 = vmatpush1.msra.mxu0 0.0
  %751 = vmatprep.subr.mxu0 0.0
  %752 = vmatpush1.msra.mxu0 0.0
  %753 = vmatprep.subr.mxu0 0.0
  %754 = vmatpush1.msra.mxu0 0.0
  %755 = vmatprep.subr.mxu0 0.0
  %756 = vmatpush1.msra.mxu0 0.0
  %757 = vmatprep.subr.mxu0 0.0
  %758 = vmatpush1.msra.mxu0 0.0
  %759 = vmatprep.subr.mxu0 0.0
  %760 = vmatpush1.msra.mxu0 0.0
  %761 = vmatprep.subr.mxu0 0.0
  %762 = vmatpush1.msra.mxu0 0.0
  %763 = vmatprep.subr.mxu0 0.0
  %764 = vmatpush1.msra.mxu0 0.0
  %765 = vmatprep.subr.mxu0 0.0
  %766 = vmatpush1.msra.mxu0 0.0
  %767 = vmatprep.subr.mxu0 0.0
  %768 = vmatpush1.msra.mxu0 0.0
  %769 = vmatprep.subr.mxu0 0.0
  %770 = vmatpush1.msra.mxu0 0.0
  %771 = vmatprep.subr.mxu0 0.0
  %772 = vmatpush1.msra.mxu0 0.0
  %773 = vmatprep.subr.mxu0 0.0
  %774 = vmatpush1.msra.mxu0 0.0
  %775 = vmatprep.subr.mxu0 0.0
  %776 = vmatpush1.msra.mxu0 0.0
  %777 = vmatprep.subr.mxu0 0.0
  %778 = vmatpush1.msra.mxu0 0.0
  %779 = vmatprep.subr.mxu0 0.0
  %780 = vmatpush1.msra.mxu0 0.0
  %781 = vmatprep.subr.mxu0 0.0
  %782 = vmatpush1.msra.mxu0 0.0
  %783 = vmatprep.mubr.f32.mxu0 0.0
  %784 = vmatmul.mubr.f32.gmra.mrb[0].mxu0 %v708
  %v785 = vpop.f32.mrb[0].mxu0
  %v786 = vadd.f32 %v689, %v785
  %v787 = vpop.f32.mrb[0].mxu0
  %788 = vmatprep.mubr.f32.mxu0 0.0
  %789 = vmatmul.mubr.f32.gmra.mrb[0].mxu0 %v711
  %v790 = vpop.f32.mrb[0].mxu0
  %v791 = vadd.f32 %v694, %v790
  %v792 = vpop.f32.mrb[0].mxu0
  %793 = vmatprep.mubr.f32.mxu0 0.0
  %794 = vmatmul.mubr.f32.gmra.mrb[0].mxu0 %v714
  %v795 = vpop.f32.mrb[0].mxu0
  %v796 = vadd.f32 %v699, %v795
  %v797 = vpop.f32.mrb[0].mxu0
  %798 = vmatprep.mubr.f32.mxu0 0.0
  %799 = vmatmul.mubr.f32.gmra.mrb[0].mxu0 %v717
  %v800 = vpop.f32.mrb[0].mxu0
  %v801 = vadd.f32 %v704, %v800
  %v802 = vpop.f32.mrb[0].mxu0
  %803 = vdwg.mxu0
  %v804 = vmax.f32 %v786, 0.0
  %v805 = vmax.f32 %v791, 0.0
  %v806 = vmax.f32 %v796, 0.0
  %v807 = vmax.f32 %v801, 0.0
  %v808 = vld [vmem:[%s7] sm:$0x1]
  %v809 = vld [vmem:[#allocation2] sm:$0x1]
  %811 = vset.pattern.permute.xlu0 0
  %812 = vperm.xlu0 %811, %v809
  %v813 = vpop.permute.xlu0 %812
  %v815 = vlaneseq
  %v816 = vshrl.u32 %v815, 7
  %v817 = vsub.s32 0, %v816
  %v818 = vrot.slane %v813, %v817
  %vm819 = vcmask 261120
  %v821 = vsel %vm819, %v808, 0
  %823 = vmatprep.subr.mxu0 0.0
  %824 = vmatpush1.msra.mxu0 %v804
  %825 = vmatprep.subr.mxu0 0.0
  %826 = vmatpush1.msra.mxu0 %v805
  %827 = vmatprep.subr.mxu0 0.0
  %828 = vmatpush1.msra.mxu0 %v806
  %829 = vmatprep.subr.mxu0 0.0
  %830 = vmatpush1.msra.mxu0 %v807
  %831 = vmatprep.subr.mxu0 0.0
  %832 = vmatpush1.msra.mxu0 0.0
  %833 = vmatprep.subr.mxu0 0.0
  %834 = vmatpush1.msra.mxu0 0.0
  %835 = vmatprep.subr.mxu0 0.0
  %836 = vmatpush1.msra.mxu0 0.0
  %837 = vmatprep.subr.mxu0 0.0
  %838 = vmatpush1.msra.mxu0 0.0
  %839 = vmatprep.subr.mxu0 0.0
  %840 = vmatpush1.msra.mxu0 0.0
  %841 = vmatprep.subr.mxu0 0.0
  %842 = vmatpush1.msra.mxu0 0.0
  %843 = vmatprep.subr.mxu0 0.0
  %844 = vmatpush1.msra.mxu0 0.0
  %845 = vmatprep.subr.mxu0 0.0
  %846 = vmatpush1.msra.mxu0 0.0
  %847 = vmatprep.subr.mxu0 0.0
  %848 = vmatpush1.msra.mxu0 0.0
  %849 = vmatprep.subr.mxu0 0.0
  %850 = vmatpush1.msra.mxu0 0.0
  %851 = vmatprep.subr.mxu0 0.0
  %852 = vmatpush1.msra.mxu0 0.0
  %853 = vmatprep.subr.mxu0 0.0
  %854 = vmatpush1.msra.mxu0 0.0
  %855 = vmatprep.subr.mxu0 0.0
  %856 = vmatpush1.msra.mxu0 0.0
  %857 = vmatprep.subr.mxu0 0.0
  %858 = vmatpush1.msra.mxu0 0.0
  %859 = vmatprep.subr.mxu0 0.0
  %860 = vmatpush1.msra.mxu0 0.0
  %861 = vmatprep.subr.mxu0 0.0
  %862 = vmatpush1.msra.mxu0 0.0
  %863 = vmatprep.subr.mxu0 0.0
  %864 = vmatpush1.msra.mxu0 0.0
  %865 = vmatprep.subr.mxu0 0.0
  %866 = vmatpush1.msra.mxu0 0.0
  %867 = vmatprep.subr.mxu0 0.0
  %868 = vmatpush1.msra.mxu0 0.0
  %869 = vmatprep.subr.mxu0 0.0
  %870 = vmatpush1.msra.mxu0 0.0
  %871 = vmatprep.subr.mxu0 0.0
  %872 = vmatpush1.msra.mxu0 0.0
  %873 = vmatprep.subr.mxu0 0.0
  %874 = vmatpush1.msra.mxu0 0.0
  %875 = vmatprep.subr.mxu0 0.0
  %876 = vmatpush1.msra.mxu0 0.0
  %877 = vmatprep.subr.mxu0 0.0
  %878 = vmatpush1.msra.mxu0 0.0
  %879 = vmatprep.subr.mxu0 0.0
  %880 = vmatpush1.msra.mxu0 0.0
  %881 = vmatprep.subr.mxu0 0.0
  %882 = vmatpush1.msra.mxu0 0.0
  %883 = vmatprep.subr.mxu0 0.0
  %884 = vmatpush1.msra.mxu0 0.0
  %885 = vmatprep.subr.mxu0 0.0
  %886 = vmatpush1.msra.mxu0 0.0
  %887 = vmatprep.mubr.f32.mxu0 0.0
  %888 = vmatmul.mubr.f32.gmra.mrb[0].mxu0 %v821
  %v889 = vpop.f32.mrb[0].mxu0
  %v890 = vadd.f32 %v818, %v889
  %v891 = vpop.f32.mrb[0].mxu0
  %892 = vdwg.mxu0
  %v893 = vsub.f32 0.0, %v890
  %v894 = vmul.f32 %v893, 1.442695
  %v895 = vpow.pop %v894
  %v896 = vadd.f32 %v895, 1.0
  %v897 = vrcp.pop %v896
  %v898 = vmul.f32 1.0, %v897
  %v899 = vmul.f32 %v890, 1.442695
  %v900 = vpow.pop %v899
  %v901 = vadd.f32 %v900, 1.0
  %v902 = vrcp.pop %v901
  %v903 = vmul.f32 1.0, %v902
  %v905 = vrot.slane %v898, 7
  %vm907 = vcmask 1040384
  %v908 = vsel %vm907, %v903, %v905
  %909 = vst [vmem:[%s9] sm:$0x3] %v908
  // Predicated region
  $region38: #{quantum_neural_net.1} parent=0 // pred_check
    _
  $region39: #{quantum_neural_net.1} parent=0 // pred_check_branch
    %911 = sbr.rel (0) target = $region41
  $region40: #{quantum_neural_net.1} parent=0 // pred_region
    _
  $region41: #{quantum_neural_net.1} parent=0 // pred_fallthru
    _
  // Predicated region
  $region42: #{quantum_neural_net.1} parent=0 // pred_check
    _
  $region43: #{quantum_neural_net.1} parent=0 // pred_check_branch
    %913 = sbr.rel (0) target = $region45
  $region44: #{quantum_neural_net.1} parent=0 // pred_region
    _
  $region45: #{quantum_neural_net.1} parent=0 // pred_fallthru
    _

</llo_original>
